<compile_context>
chip_gen: v7x
topology: tpu7x:2x2x1
jax: 0.10.0
libtpu: 0.0.40
codegen_flags: <defaults>
</compile_context>

<pallas_src>
import functools

import jax
import jax.numpy as jnp
from jax.experimental import pallas as pl
from jax.experimental.pallas import tpu as pltpu

IGNORE_INDEX = -100
_MIB = 1024 * 1024


def _round_up(x, m):
    return ((x + m - 1) // m) * m


def _cdiv(a, b):
    return (a + b - 1) // b


def _vmem_capacity_bytes():
    """Physical VMEM of the local TPU; conservative 64 MiB fallback."""
    try:
        info = pltpu.get_tpu_info()
        cap = getattr(info, "vmem_capacity_bytes", None)
        if cap:
            return int(cap)
    except Exception:
        pass
    return 64 * _MIB


def _vmem_estimate(tm, tv, h):
    """Bytes of VMEM used by one grid step (I/O tiles double-buffered by the
    BlockSpec pipeline) PLUS the f32 per-tile intermediates the kernel body
    materializes (logits / exp / iota / select temporaries)."""
    return (2 * tm * h * 2          # hidden tile, bf16, double-buffered
            + 2 * h * tv * 2        # weight tile, bf16, double-buffered
            + 2 * tm * 4            # label tile, int32, double-buffered
            + 2 * tm * 4            # loss tile, f32, double-buffered
            + 3 * tm * 4            # m / l / tgt scratch accumulators
            + 4 * tm * tv * 4)      # f32 logits + exp + iota + masks


def _fused_ce_kernel(h_ref, w_ref, lab_ref, loss_ref,
                     m_sc, l_sc, tgt_sc, *, v_actual, mask_cols):
    """Fused LM-head matmul + online-softmax cross-entropy.

    Grid = (row tiles, vocab tiles).  The vocab axis is a reduction axis:
    scratch holds running max (m), running sum-of-exp (l) and the gathered
    target logit (tgt) per row; the per-row loss is written on the last
    vocab tile.  Padded vocab columns are masked to -inf via a per-tile
    local threshold so they never perturb the log-sum-exp.
    """
    vj = pl.program_id(1)

    @pl.when(vj == 0)
    def _():
        m_sc[...] = jnp.full_like(m_sc, -jnp.inf)
        l_sc[...] = jnp.zeros_like(l_sc)
        tgt_sc[...] = jnp.zeros_like(tgt_sc)

    # MXU: bf16 x bf16 -> f32 logits tile for this (row-tile, vocab-tile).
    logits = jnp.dot(h_ref[...], w_ref[...],
                     preferred_element_type=jnp.float32)        # (TM, TV) f32
    tm, tv = logits.shape
    labels = lab_ref[...]                                       # (TM, 1) int32

    # Local (per-tile) column ids; global offsets handled with scalar shifts.
    col_local = jax.lax.broadcasted_iota(jnp.int32, (tm, tv), 1)
    if mask_cols:
        # Only the last vocab tile has padded columns (v_pad - v < tv), so
        # this threshold passes every column on earlier tiles.
        logits = jnp.where(col_local < (v_actual - vj * tv), logits, -jnp.inf)

    # Gather the logit at the label position (if it falls inside this tile).
    hit = col_local == (labels - vj * tv)                       # (TM, TV)
    tgt_sc[...] += jnp.sum(jnp.where(hit, logits, 0.0), axis=-1, keepdims=True)

    # Online log-sum-exp over the vocab axis.
    m_new = jnp.maximum(m_sc[...], logits.max(axis=-1, keepdims=True))
    l_sc[...] = (l_sc[...] * jnp.exp(m_sc[...] - m_new)
                 + jnp.sum(jnp.exp(logits - m_new), axis=-1, keepdims=True))
    m_sc[...] = m_new

    @pl.when(vj == pl.num_programs(1) - 1)
    def _():
        valid = labels != IGNORE_INDEX
        lse = m_sc[...] + jnp.log(l_sc[...])
        loss_ref[...] = jnp.where(valid, lse - tgt_sc[...], 0.0)


def prepare_lm_head(lm_head_w, *, tv=512):
    """One-time LM-head prep (do NOT run per training step).

    Casts the [H, V] weight to bf16 and pads the vocab dim to a multiple of
    the vocab tile, so the per-step jitted function never re-reads / rewrites
    the full weight outside the kernel.
    """
    v = lm_head_w.shape[1]
    tv = _round_up(tv, 128)
    v_pad = _round_up(max(v, 128), tv)
    w = lm_head_w.astype(jnp.bfloat16)
    if v_pad != v:
        w = jnp.pad(w, ((0, 0), (0, v_pad - v)))
    return w, v


@functools.partial(jax.jit, static_argnames=("v_actual", "tm", "tv"))
def fused_cross_entropy(hidden, w_padded, labels, *, v_actual, tm=1024, tv=512):
    """loss = mean over valid tokens of -log p(label | hidden @ W)."""
    n, h = hidden.shape
    v_pad = w_padded.shape[1]
    assert v_pad % 128 == 0, "use prepare_lm_head(): vocab must be padded to 128"
    assert v_actual <= v_pad

    # Vocab tile: largest multiple of 128 <= tv that divides v_pad.
    tv_eff = min(_round_up(tv, 128), v_pad)
    while v_pad % tv_eff:
        tv_eff -= 128

    # VMEM budget per generation: ~104 MiB on 128-MiB parts (v5e/v6e),
    # ~80% of capacity with >=12 MiB headroom on the 64-MiB v7x.
    cap = _vmem_capacity_bytes()
    if cap >= 128 * _MIB:
        budget = 104 * _MIB
    else:
        budget = max(32 * _MIB, min(int(cap * 0.8), cap - 12 * _MIB))

    # Row tile: largest MXU-friendly candidate (multiple of 16) that fits the
    # VMEM budget together with the f32 intermediates.
    tm_cap = _round_up(min(tm, max(n, 16)), 16)
    cands = [c for c in (1024, 896, 768, 640, 512, 384, 256, 128, 64, 32, 16)
             if c <= tm_cap]
    if not cands or cands[0] != tm_cap:
        cands = [tm_cap] + cands
    tm_eff = cands[-1]
    for c in cands:
        if _vmem_estimate(c, tv_eff, h) <= budget:
            tm_eff = c
            break

    # Prefer >= 2 row tiles so ("parallel", ...) can split rows across the
    # two TensorCores on megacore parts.
    if n > 16 and _cdiv(n, tm_eff) < 2:
        tm_eff = max(16, _round_up(_cdiv(n, 2), 16))

    n_pad = _round_up(n, tm_eff)

    # Per-step data: bf16 streaming of the (small) hidden; weight was
    # pre-cast / pre-padded once in prepare_lm_head.
    hidden_b = hidden.astype(jnp.bfloat16)
    labels2d = labels.reshape(n, 1).astype(jnp.int32)
    if n_pad != n:
        hidden_b = jnp.pad(hidden_b, ((0, n_pad - n), (0, 0)))
        labels2d = jnp.pad(labels2d, ((0, n_pad - n), (0, 0)),
                           constant_values=IGNORE_INDEX)

    grid = (n_pad // tm_eff, v_pad // tv_eff)
    mask_cols = v_actual != v_pad
    kernel = functools.partial(_fused_ce_kernel,
                               v_actual=v_actual, mask_cols=mask_cols)

    vmem_est = _vmem_estimate(tm_eff, tv_eff, h)
    vmem_limit = int(max(min(int(1.5 * vmem_est), budget), 32 * _MIB))
    vmem_limit = max(vmem_limit, vmem_est)

    # Advisory cost estimate for the XLA scheduler.
    cost = pl.CostEstimate(
        flops=int(2 * n_pad * h * v_pad),
        transcendentals=int(n_pad * v_pad),
        bytes_accessed=int(grid[0] * h * v_pad * 2      # weight re-streams
                           + n_pad * h * 2              # hidden
                           + n_pad * 4 + n_pad * 4))    # labels + loss

    loss_rows = pl.pallas_call(
        kernel,
        out_shape=jax.ShapeDtypeStruct((n_pad, 1), jnp.float32),
        grid_spec=pltpu.PrefetchScalarGridSpec(
            num_scalar_prefetch=0,
            grid=grid,
            in_specs=[
                pl.BlockSpec((tm_eff, h), lambda i, j: (i, 0)),     # hidden
                pl.BlockSpec((h, tv_eff), lambda i, j: (0, j)),     # weight
                pl.BlockSpec((tm_eff, 1), lambda i, j: (i, 0)),     # labels
            ],
            out_specs=pl.BlockSpec((tm_eff, 1), lambda i, j: (i, 0)),
            scratch_shapes=[
                pltpu.VMEM((tm_eff, 1), jnp.float32),   # running max m
                pltpu.VMEM((tm_eff, 1), jnp.float32),   # running sum-exp l
                pltpu.VMEM((tm_eff, 1), jnp.float32),   # target logit
            ],
        ),
        compiler_params=pltpu.CompilerParams(
            dimension_semantics=("parallel", "arbitrary"),
            vmem_limit_bytes=vmem_limit),
        cost_estimate=cost,
    )(hidden_b, w_padded, labels2d)

    num_valid = jnp.maximum(
        jnp.sum(labels != IGNORE_INDEX).astype(jnp.float32), 1.0)
    return jnp.sum(loss_rows) / num_valid


class Seq2SeqTrainStep:
    """Pallas equivalent of Seq2Seq.forward(mode='train') hot path.

    The LM-head weight is prepared (bf16 cast + vocab pad) once at init;
    each call fuses the LM-head projection with the ignore_index=-100
    cross-entropy and returns {'loss': scalar} like the torch module.
    """

    def __init__(self, lm_head_w, *, tm=1024, tv=512):
        self.tm, self.tv = tm, tv
        self.w_padded, self.v_actual = prepare_lm_head(lm_head_w, tv=tv)

    def __call__(self, hidden_states, labels):
        b, s, h = hidden_states.shape
        loss = fused_cross_entropy(
            hidden_states.reshape(b * s, h), self.w_padded,
            labels.reshape(b * s),
            v_actual=self.v_actual, tm=self.tm, tv=self.tv)
        return {"loss": loss}


def _reference_loss(hidden_states, lm_head_w, labels):
    """Pure-JAX reference (same bf16 inputs, f32 accumulation), ignore=-100."""
    b, s, h = hidden_states.shape
    hb = hidden_states.reshape(b * s, h).astype(jnp.bfloat16)
    wb = lm_head_w.astype(jnp.bfloat16)
    logits = jnp.dot(hb, wb, preferred_element_type=jnp.float32)        # [N,V]
    lab = labels.reshape(-1)
    lse = jax.nn.logsumexp(logits, axis=-1)
    safe_lab = jnp.where(lab == IGNORE_INDEX, 0, lab)
    tgt = jnp.take_along_axis(logits, safe_lab[:, None], axis=-1)[:, 0]
    per_tok = jnp.where(lab == IGNORE_INDEX, 0.0, lse - tgt)
    n_valid = jnp.maximum(jnp.sum(lab != IGNORE_INDEX), 1)
    return jnp.sum(per_tok) / n_valid


# TODO(synk): T5Adapter/PlugD/HyperPlugD backbone, LlamaTokenizer, and the
# autoregressive generate_* paths (valid/test mode) have no in-script
# definitions / no clean Pallas equivalent; only the train-mode fused
# cross-entropy hot path is implemented here.

if __name__ == "__main__":
    key = jax.random.PRNGKey(0)
    k_h, k_w, k_lab, k_mask = jax.random.split(key, 4)

    B, S, H, V = 2, 8, 32, 256       # small synthetic shapes
    hidden = jax.random.normal(k_h, (B, S, H), dtype=jnp.float32)
    lm_w = 0.02 * jax.random.normal(k_w, (H, V), dtype=jnp.float32)
    labels = jax.random.randint(k_lab, (B, S), 0, V, dtype=jnp.int32)
    # mark ~25% of positions as ignored (-100), mimicking padded label tokens
    ignore = jax.random.uniform(k_mask, (B, S)) < 0.25
    labels = jnp.where(ignore, IGNORE_INDEX, labels)

    step = Seq2SeqTrainStep(lm_w)
    out = step(hidden, labels)
    loss = jax.block_until_ready(out["loss"])
    ref = _reference_loss(hidden, lm_w, labels)
    assert jnp.allclose(loss, ref, rtol=5e-3, atol=5e-3), (loss, ref)

    # Vocab not a multiple of 128: exercises the padded-column (-inf) masking.
    V2 = 250
    lm_w2 = 0.02 * jax.random.normal(k_w, (H, V2), dtype=jnp.float32)
    labels2 = jnp.where(ignore, IGNORE_INDEX,
                        jax.random.randint(k_lab, (B, S), 0, V2, jnp.int32))
    step2 = Seq2SeqTrainStep(lm_w2)
    out2 = step2(hidden, labels2)
    loss2 = jax.block_until_ready(out2["loss"])
    ref2 = _reference_loss(hidden, lm_w2, labels2)
    assert jnp.allclose(loss2, ref2, rtol=5e-3, atol=5e-3), (loss2, ref2)

    # Vocab an exact tile multiple: exercises the unmasked path with more
    # than one vocab tile (online LSE reduction across the grid axis).
    V3 = 1024
    lm_w3 = 0.02 * jax.random.normal(k_w, (H, V3), dtype=jnp.float32)
    labels3 = jnp.where(ignore, IGNORE_INDEX,
                        jax.random.randint(k_lab, (B, S), 0, V3, jnp.int32))
    step3 = Seq2SeqTrainStep(lm_w3)
    out3 = step3(hidden, labels3)
    loss3 = jax.block_until_ready(out3["loss"])
    ref3 = _reference_loss(hidden, lm_w3, labels3)
    assert jnp.allclose(loss3, ref3, rtol=5e-3, atol=5e-3), (loss3, ref3)

    print("KERNEL_OK")
</pallas_src>

<mosaic_0001>
module attributes {stable_mosaic.version = 11 : i64} {
  func.func @_fused_ce_kernel(%arg0: i32, %arg1: i32, %arg2: memref<16x32xbf16, #tpu.memory_space<vmem>>, %arg3: memref<32x512xbf16, #tpu.memory_space<vmem>>, %arg4: memref<16x1xi32, #tpu.memory_space<vmem>>, %arg5: memref<16x1xf32, #tpu.memory_space<vmem>>, %arg6: memref<16x1xf32, #tpu.memory_space<vmem>>, %arg7: memref<16x1xf32, #tpu.memory_space<vmem>>, %arg8: memref<16x1xf32, #tpu.memory_space<vmem>>) attributes {dimension_semantics = [#tpu.dimension_semantics<parallel>, #tpu.dimension_semantics<arbitrary>], iteration_bounds = array<i64: 1, 1>, scalar_prefetch = 0 : i64, scratch_operands = 3 : i64, tpu.core_type = #tpu.core_type<tc>, window_params = [{transform_indices = @transform_0, window_bounds = array<i64: 16, 32>}, {transform_indices = @transform_1, window_bounds = array<i64: 32, 512>}, {transform_indices = @transform_2, window_bounds = array<i64: 16, 1>}, {transform_indices = @transform_3, window_bounds = array<i64: 16, 1>}]} {
    %c0_i32 = arith.constant 0 : i32
    %0 = arith.cmpi eq, %arg1, %c0_i32 : i32
    %1 = arith.extui %0 : i1 to i32
    %c0_i32_0 = arith.constant 0 : i32
    %2 = arith.cmpi ne, %1, %c0_i32_0 : i32
    scf.if %2 {
      %cst_28 = arith.constant 0xFF800000 : f32
      %46 = vector.broadcast %cst_28 : f32 to vector<16x1xf32>
      %c0_29 = arith.constant 0 : index
      %c0_30 = arith.constant 0 : index
      %47 = vector.load %arg6[%c0_29, %c0_30] : memref<16x1xf32, #tpu.memory_space<vmem>>, vector<16x1xf32>
      tpu.vector_store %arg6[%c0_29, %c0_30], %46 {strides = array<i32>} : memref<16x1xf32, #tpu.memory_space<vmem>>, vector<16x1xf32>,
      %cst_31 = arith.constant 0.000000e+00 : f32
      %48 = vector.broadcast %cst_31 : f32 to vector<16x1xf32>
      %c0_32 = arith.constant 0 : index
      %c0_33 = arith.constant 0 : index
      %49 = vector.load %arg7[%c0_32, %c0_33] : memref<16x1xf32, #tpu.memory_space<vmem>>, vector<16x1xf32>
      tpu.vector_store %arg7[%c0_32, %c0_33], %48 {strides = array<i32>} : memref<16x1xf32, #tpu.memory_space<vmem>>, vector<16x1xf32>,
      %cst_34 = arith.constant 0.000000e+00 : f32
      %50 = vector.broadcast %cst_34 : f32 to vector<16x1xf32>
      %c0_35 = arith.constant 0 : index
      %c0_36 = arith.constant 0 : index
      %51 = vector.load %arg8[%c0_35, %c0_36] : memref<16x1xf32, #tpu.memory_space<vmem>>, vector<16x1xf32>
      tpu.vector_store %arg8[%c0_35, %c0_36], %50 {strides = array<i32>} : memref<16x1xf32, #tpu.memory_space<vmem>>, vector<16x1xf32>,
    } else {
    }
    %c0 = arith.constant 0 : index
    %c0_1 = arith.constant 0 : index
    %3 = vector.load %arg2[%c0, %c0_1] : memref<16x32xbf16, #tpu.memory_space<vmem>>, vector<16x32xbf16>
    %c0_2 = arith.constant 0 : index
    %c0_3 = arith.constant 0 : index
    %4 = vector.load %arg3[%c0_2, %c0_3] : memref<32x512xbf16, #tpu.memory_space<vmem>>, vector<32x512xbf16>
    %cst = arith.constant dense<0.000000e+00> : vector<16x512xf32>
    %5 = tpu.matmul %3, %4, %cst {dimension_numbers = #tpu.dot_dimension_numbers<[1], [0], [0], [1], [0, 0, 1, 1], [], []>} : vector<16x32xbf16>, vector<32x512xbf16>, vector<16x512xf32> -> vector<16x512xf32>
    %c0_4 = arith.constant 0 : index
    %c0_5 = arith.constant 0 : index
    %6 = vector.load %arg4[%c0_4, %c0_5] : memref<16x1xi32, #tpu.memory_space<vmem>>, vector<16x1xi32>
    %7 = tpu.iota {dimensions = array<i32: 1>} : vector<16x512xi32>
    %c512_i32 = arith.constant 512 : i32
    %8 = arith.muli %arg1, %c512_i32 : i32
    %c256_i32 = arith.constant 256 : i32
    %9 = arith.subi %c256_i32, %8 : i32
    %10 = vector.broadcast %9 : i32 to vector<16x512xi32>
    %11 = arith.cmpi slt, %7, %10 : vector<16x512xi32>
    %cst_6 = arith.constant 0xFF800000 : f32
    %12 = vector.broadcast %cst_6 : f32 to vector<16x512xf32>
    %13 = arith.select %11, %5, %12 : vector<16x512xi1>, vector<16x512xf32>
    %c512_i32_7 = arith.constant 512 : i32
    %14 = arith.muli %arg1, %c512_i32_7 : i32
    %15 = vector.broadcast %14 : i32 to vector<16x1xi32>
    %16 = arith.subi %6, %15 : vector<16x1xi32>
    %17 = vector.broadcast %16 : vector<16x1xi32> to vector<16x512xi32>
    %18 = arith.cmpi eq, %7, %17 : vector<16x512xi32>
    %c0_8 = arith.constant 0 : index
    %c0_9 = arith.constant 0 : index
    %19 = vector.load %arg8[%c0_8, %c0_9] : memref<16x1xf32, #tpu.memory_space<vmem>>, vector<16x1xf32>
    %cst_10 = arith.constant 0.000000e+00 : f32
    %20 = vector.broadcast %cst_10 : f32 to vector<16x512xf32>
    %21 = arith.select %18, %13, %20 : vector<16x512xi1>, vector<16x512xf32>
    %cst_11 = arith.constant dense<0.000000e+00> : vector<16xf32>
    %22 = vector.multi_reduction <add>, %21, %cst_11 [1] : vector<16x512xf32> to vector<16xf32>
    %23 = vector.shape_cast %22 : vector<16xf32> to vector<16x1xf32>
    %24 = arith.addf %19, %23 : vector<16x1xf32>
    %c0_12 = arith.constant 0 : index
    %c0_13 = arith.constant 0 : index
    %25 = vector.load %arg8[%c0_12, %c0_13] : memref<16x1xf32, #tpu.memory_space<vmem>>, vector<16x1xf32>
    tpu.vector_store %arg8[%c0_12, %c0_13], %24 {strides = array<i32>} : memref<16x1xf32, #tpu.memory_space<vmem>>, vector<16x1xf32>,
    %c0_14 = arith.constant 0 : index
    %c0_15 = arith.constant 0 : index
    %26 = vector.load %arg6[%c0_14, %c0_15] : memref<16x1xf32, #tpu.memory_space<vmem>>, vector<16x1xf32>
    %cst_16 = arith.constant dense<0xFF800000> : vector<16xf32>
    %27 = vector.multi_reduction <maximumf>, %13, %cst_16 [1] : vector<16x512xf32> to vector<16xf32>
    %28 = vector.shape_cast %27 : vector<16xf32> to vector<16x1xf32>
    %29 = arith.maximumf %26, %28 : vector<16x1xf32>
    %c0_17 = arith.constant 0 : index
    %c0_18 = arith.constant 0 : index
    %30 = vector.load %arg7[%c0_17, %c0_18] : memref<16x1xf32, #tpu.memory_space<vmem>>, vector<16x1xf32>
    %c0_19 = arith.constant 0 : index
    %c0_20 = arith.constant 0 : index
    %31 = vector.load %arg6[%c0_19, %c0_20] : memref<16x1xf32, #tpu.memory_space<vmem>>, vector<16x1xf32>
    %32 = arith.subf %31, %29 : vector<16x1xf32>
    %33 = math.exp %32 : vector<16x1xf32>
    %34 = arith.mulf %30, %33 : vector<16x1xf32>
    %35 = vector.broadcast %29 : vector<16x1xf32> to vector<16x512xf32>
    %36 = arith.subf %13, %35 : vector<16x512xf32>
    %37 = math.exp %36 : vector<16x512xf32>
    %cst_21 = arith.constant dense<0.000000e+00> : vector<16xf32>
    %38 = vector.multi_reduction <add>, %37, %cst_21 [1] : vector<16x512xf32> to vector<16xf32>
    %39 = vector.shape_cast %38 : vector<16xf32> to vector<16x1xf32>
    %40 = arith.addf %34, %39 : vector<16x1xf32>
    %c0_22 = arith.constant 0 : index
    %c0_23 = arith.constant 0 : index
    %41 = vector.load %arg7[%c0_22, %c0_23] : memref<16x1xf32, #tpu.memory_space<vmem>>, vector<16x1xf32>
    tpu.vector_store %arg7[%c0_22, %c0_23], %40 {strides = array<i32>} : memref<16x1xf32, #tpu.memory_space<vmem>>, vector<16x1xf32>,
    %c0_24 = arith.constant 0 : index
    %c0_25 = arith.constant 0 : index
    %42 = vector.load %arg6[%c0_24, %c0_25] : memref<16x1xf32, #tpu.memory_space<vmem>>, vector<16x1xf32>
    tpu.vector_store %arg6[%c0_24, %c0_25], %29 {strides = array<i32>} : memref<16x1xf32, #tpu.memory_space<vmem>>, vector<16x1xf32>,
    %c0_i32_26 = arith.constant 0 : i32
    %43 = arith.cmpi eq, %arg1, %c0_i32_26 : i32
    %44 = arith.extui %43 : i1 to i32
    %c0_i32_27 = arith.constant 0 : i32
    %45 = arith.cmpi ne, %44, %c0_i32_27 : i32
    scf.if %45 {
      %c-100_i32 = arith.constant -100 : i32
      %46 = vector.broadcast %c-100_i32 : i32 to vector<16x1xi32>
      %47 = arith.cmpi ne, %6, %46 : vector<16x1xi32>
      %c0_28 = arith.constant 0 : index
      %c0_29 = arith.constant 0 : index
      %48 = vector.load %arg6[%c0_28, %c0_29] : memref<16x1xf32, #tpu.memory_space<vmem>>, vector<16x1xf32>
      %c0_30 = arith.constant 0 : index
      %c0_31 = arith.constant 0 : index
      %49 = vector.load %arg7[%c0_30, %c0_31] : memref<16x1xf32, #tpu.memory_space<vmem>>, vector<16x1xf32>
      %50 = math.log %49 : vector<16x1xf32>
      %51 = arith.addf %48, %50 : vector<16x1xf32>
      %c0_32 = arith.constant 0 : index
      %c0_33 = arith.constant 0 : index
      %52 = vector.load %arg8[%c0_32, %c0_33] : memref<16x1xf32, #tpu.memory_space<vmem>>, vector<16x1xf32>
      %53 = arith.subf %51, %52 : vector<16x1xf32>
      %cst_34 = arith.constant 0.000000e+00 : f32
      %54 = vector.broadcast %cst_34 : f32 to vector<16x1xf32>
      %55 = arith.select %47, %53, %54 : vector<16x1xi1>, vector<16x1xf32>
      %c0_35 = arith.constant 0 : index
      %c0_36 = arith.constant 0 : index
      %56 = vector.load %arg5[%c0_35, %c0_36] : memref<16x1xf32, #tpu.memory_space<vmem>>, vector<16x1xf32>
      tpu.vector_store %arg5[%c0_35, %c0_36], %55 {strides = array<i32>} : memref<16x1xf32, #tpu.memory_space<vmem>>, vector<16x1xf32>,
    } else {
    }
    return
  }
  func.func @transform_0(%arg0: i32, %arg1: i32) -> (i32, i32) {
    %c0_i32 = arith.constant 0 : i32
    %c0_i32_0 = arith.constant 0 : i32
    return %arg0, %c0_i32 : i32, i32
  }
  func.func @transform_1(%arg0: i32, %arg1: i32) -> (i32, i32) {
    %c0_i32 = arith.constant 0 : i32
    %c0_i32_0 = arith.constant 0 : i32
    return %c0_i32, %arg1 : i32, i32
  }
  func.func @transform_2(%arg0: i32, %arg1: i32) -> (i32, i32) {
    %c0_i32 = arith.constant 0 : i32
    %c0_i32_0 = arith.constant 0 : i32
    return %arg0, %c0_i32 : i32, i32
  }
  func.func @transform_3(%arg0: i32, %arg1: i32) -> (i32, i32) {
    %c0_i32 = arith.constant 0 : i32
    %c0_i32_0 = arith.constant 0 : i32
    return %arg0, %c0_i32 : i32, i32
  }
}

</mosaic_0001>

<llo_original>
// kernel: fused_cross_entropy.1
$region0: #{fused_cross_entropy.1}
  #allocation0 [shape = 'u32[]', space=smem, size = 0x4, offset = 0x4, fixed_abs, tag = 'smem constant byte address 0x4 - core index']
  #allocation1 [shape = 'u32[144,128]{1,0:T(1,128)}', space=vmem, size = 0x12000, scoped, tag = 'internal scratch']
  #allocation2 [shape = 'f32[16,1]{1,0:T(8,128)}', space=vmem, size = 0x2000, scoped, tag = 'scratch operand']
  #allocation3 [shape = 'f32[16,1]{1,0:T(8,128)}', space=vmem, size = 0x2000, scoped, tag = 'scratch operand']
  #allocation4 [shape = 'f32[16,1]{1,0:T(8,128)}', space=vmem, size = 0x2000, scoped, tag = 'scratch operand']
  %s0 = inlined_call_operand.vmem [shape: bf16[16,32], index: 0, kind: input, shape index: {}]
  %s1 = inlined_call_operand.hbm [shape: bf16[32,512], index: 1, kind: input, shape index: {}]
  %s2 = inlined_call_operand.vmem [shape: s32[16,1], index: 2, kind: input, shape index: {}]
  %s3 = inlined_call_operand.vmem [shape: f32[16,1], index: 3, kind: output, shape index: {}]
  %s4 = sld [smem:[#allocation0]]
  $region34: #{fused_cross_entropy.1} parent=0
    _
  %s6 = ssub.s32 1, %s4
  %s7 = scalar_select 0, %s6, %s4
  $region1: #{fused_cross_entropy.1} parent=0
    #allocation5 [shape = 'u8[32768]{0}', space=vmem, size = 0x8000, scoped, tag = 'input window, operand 1, single buffered']
    #allocation6 [shape = 's32[1]{0}', space=sflag, size = 0x4, scoped, tag = 'scoped memory for fused_cross_entropy.1']
    %8 = vsyncpa [#allocation6], 0
    // Predicated region
    $region2: #{fused_cross_entropy.1} parent=1 // pred_check
      _
    $region3: #{fused_cross_entropy.1} parent=1 // pred_check_branch
      %10 = sbr.rel (0) target = $region5
    $region4: #{fused_cross_entropy.1} parent=1 // pred_region
      _
    $region5: #{fused_cross_entropy.1} parent=1 // pred_fallthru
      _
    // Predicated region
    $region6: #{fused_cross_entropy.1} parent=1 // pred_check
      _
    $region7: #{fused_cross_entropy.1} parent=1 // pred_check_branch
      %12 = sbr.rel (0) target = $region9
    $region8: #{fused_cross_entropy.1} parent=1 // pred_region
      %s14 = ssub.s32 1024, 1024
      %15 = vsyncadd [#allocation6], %s14
      %s16 = sshll.u32 [#allocation5], 4
      %s17 = int_to_ptr.vmem [resolvable:$true] %s16
      %22 = dma.hbm_to_vmem [thread:$0]  %s1, 1024, %s17, [#allocation6], 256, 256, 16
    $region9: #{fused_cross_entropy.1} parent=1 // pred_fallthru
      _
    // Predicated region
    $region10: #{fused_cross_entropy.1} parent=1 // pred_check
      _
    $region11: #{fused_cross_entropy.1} parent=1 // pred_check_branch
      %24 = sbr.rel (0) target = $region13
    $region12: #{fused_cross_entropy.1} parent=1 // pred_region
      _
    $region13: #{fused_cross_entropy.1} parent=1 // pred_fallthru
      _
    // Predicated region
    $region14: #{fused_cross_entropy.1} parent=1 // pred_check
      _
    $region15: #{fused_cross_entropy.1} parent=1 // pred_check_branch
      %26 = sbr.rel (0) target = $region17
    $region16: #{fused_cross_entropy.1} parent=1 // pred_region
      %27 = dma.done [#allocation6], 1024
    $region17: #{fused_cross_entropy.1} parent=1 // pred_fallthru
      _
    %p29 = scmp.eq.s32.totalorder 0, 0
    // Predicated region
    $region18: #{fused_cross_entropy.1} parent=1 // pred_check
      %p30 = pneg %p29
    $region19: #{fused_cross_entropy.1} parent=1 // pred_check_branch
      %32 = sbr.rel (%p30) target = $region21
    $region20: #{fused_cross_entropy.1} parent=1 // pred_region
      %vm33 = vcmask 7168
      %34 = vst.msk [vmem:[#allocation2] sm:$0xff] %vm33, -inf
      %35 = vst.msk [vmem:[#allocation2 + $0x8] sm:$0xff] %vm33, -inf
      %36 = vst.msk [vmem:[#allocation3] sm:$0xff] %vm33, 0.0
      %37 = vst.msk [vmem:[#allocation3 + $0x8] sm:$0xff] %vm33, 0.0
      %38 = vst.msk [vmem:[#allocation4] sm:$0xff] %vm33, 0.0
      %39 = vst.msk [vmem:[#allocation4 + $0x8] sm:$0xff] %vm33, 0.0
    $region21: #{fused_cross_entropy.1} parent=1 // pred_fallthru
      _
    %v40 = vld [vmem:[%s0] sm:$0xf]
    %v41 = vld [vmem:[%s0 + $0x4] sm:$0xf]
    %v42 = vld [vmem:[#allocation5] sm:$0xff]
    %v43 = vld [vmem:[#allocation5 + $0x8] sm:$0xff]
    %v44 = vld [vmem:[#allocation5 + $0x10] sm:$0xff]
    %v45 = vld [vmem:[#allocation5 + $0x18] sm:$0xff]
    %v46 = vld [vmem:[#allocation5 + $0x20] sm:$0xff]
    %v47 = vld [vmem:[#allocation5 + $0x28] sm:$0xff]
    %v48 = vld [vmem:[#allocation5 + $0x30] sm:$0xff]
    %v49 = vld [vmem:[#allocation5 + $0x38] sm:$0xff]
    %v52 = vunpack.c.l.b16 %v40
    %v53 = vunpack.c.l.b16 %v41
    %v54 = vpack.c.b16 %v53, %v52
    %v63 = vunpack.c.l.b16 %v42
    %v64 = vunpack.c.h.b16 %v42
    %v65 = vunpack.c.l.b16 %v43
    %v66 = vunpack.c.h.b16 %v43
    %v67 = vunpack.c.l.b16 %v44
    %v68 = vunpack.c.h.b16 %v44
    %v69 = vunpack.c.l.b16 %v45
    %v70 = vunpack.c.h.b16 %v45
    %v71 = vunpack.c.l.b16 %v46
    %v72 = vunpack.c.h.b16 %v46
    %v73 = vunpack.c.l.b16 %v47
    %v74 = vunpack.c.h.b16 %v47
    %v75 = vunpack.c.l.b16 %v48
    %v76 = vunpack.c.h.b16 %v48
    %v77 = vunpack.c.l.b16 %v49
    %v78 = vunpack.c.h.b16 %v49
    %v79 = vpack.c.b16 %v67, %v63
    %v80 = vpack.c.b16 %v68, %v64
    %v81 = vpack.c.b16 %v69, %v65
    %v82 = vpack.c.b16 %v70, %v66
    %v83 = vpack.c.b16 %v75, %v71
    %v84 = vpack.c.b16 %v76, %v72
    %v85 = vpack.c.b16 %v77, %v73
    %v86 = vpack.c.b16 %v78, %v74
    %vm95 = vcmask 261120
    %v97 = vsel %vm95, %v54, 0
    %99 = vmatprep.subr.bf16.mxu0 %v80
    %100 = vmatpush1.bf16.msra.mxu0 %v79
    %101 = vmatprep.subr.bf16.mxu0 %v84
    %102 = vmatpush1.bf16.msra.mxu0 %v83
    %103 = vmatprep.subr.bf16.mxu0 0
    %104 = vmatpush1.bf16.msra.mxu0 0
    %105 = vmatprep.subr.bf16.mxu0 0
    %106 = vmatpush1.bf16.msra.mxu0 0
    %107 = vmatprep.subr.bf16.mxu0 0
    %108 = vmatpush1.bf16.msra.mxu0 0
    %109 = vmatprep.subr.bf16.mxu0 0
    %110 = vmatpush1.bf16.msra.mxu0 0
    %111 = vmatprep.subr.bf16.mxu0 0
    %112 = vmatpush1.bf16.msra.mxu0 0
    %113 = vmatprep.subr.bf16.mxu0 0
    %114 = vmatpush1.bf16.msra.mxu0 0
    %115 = vmatprep.subr.bf16.mxu0 0
    %116 = vmatpush1.bf16.msra.mxu0 0
    %117 = vmatprep.subr.bf16.mxu0 0
    %118 = vmatpush1.bf16.msra.mxu0 0
    %119 = vmatprep.subr.bf16.mxu0 0
    %120 = vmatpush1.bf16.msra.mxu0 0
    %121 = vmatprep.subr.bf16.mxu0 0
    %122 = vmatpush1.bf16.msra.mxu0 0
    %123 = vmatprep.subr.bf16.mxu0 0
    %124 = vmatpush1.bf16.msra.mxu0 0
    %125 = vmatprep.subr.bf16.mxu0 0
    %126 = vmatpush1.bf16.msra.mxu0 0
    %127 = vmatprep.subr.bf16.mxu0 0
    %128 = vmatpush1.bf16.msra.mxu0 0
    %129 = vmatprep.subr.bf16.mxu0 0
    %130 = vmatpush1.bf16.msra.mxu0 0
    %131 = vmatprep.mubr.bf16.mxu0 0
    %132 = vmatmul.mubr.bf16.gmra.mrb[0].mxu0 %v97
    %v133 = vpop.f32.mrb[0].mxu0
    %v134 = vadd.f32 0.0, %v133
    %v135 = vpop.f32.mrb[0].mxu0
    %v136 = vadd.f32 0.0, %v135
    %v137 = vpop.f32.mrb[0].mxu0
    %v138 = vadd.f32 0.0, %v137
    %v139 = vpop.f32.mrb[0].mxu0
    %v140 = vadd.f32 0.0, %v139
    %141 = vdwg.mxu0
    %142 = vmatprep.subr.bf16.mxu0 %v82
    %143 = vmatpush1.bf16.msra.mxu0 %v81
    %144 = vmatprep.subr.bf16.mxu0 %v86
    %145 = vmatpush1.bf16.msra.mxu0 %v85
    %146 = vmatprep.subr.bf16.mxu0 0
    %147 = vmatpush1.bf16.msra.mxu0 0
    %148 = vmatprep.subr.bf16.mxu0 0
    %149 = vmatpush1.bf16.msra.mxu0 0
    %150 = vmatprep.subr.bf16.mxu0 0
    %151 = vmatpush1.bf16.msra.mxu0 0
    %152 = vmatprep.subr.bf16.mxu0 0
    %153 = vmatpush1.bf16.msra.mxu0 0
    %154 = vmatprep.subr.bf16.mxu0 0
    %155 = vmatpush1.bf16.msra.mxu0 0
    %156 = vmatprep.subr.bf16.mxu0 0
    %157 = vmatpush1.bf16.msra.mxu0 0
    %158 = vmatprep.subr.bf16.mxu0 0
    %159 = vmatpush1.bf16.msra.mxu0 0
    %160 = vmatprep.subr.bf16.mxu0 0
    %161 = vmatpush1.bf16.msra.mxu0 0
    %162 = vmatprep.subr.bf16.mxu0 0
    %163 = vmatpush1.bf16.msra.mxu0 0
    %164 = vmatprep.subr.bf16.mxu0 0
    %165 = vmatpush1.bf16.msra.mxu0 0
    %166 = vmatprep.subr.bf16.mxu0 0
    %167 = vmatpush1.bf16.msra.mxu0 0
    %168 = vmatprep.subr.bf16.mxu0 0
    %169 = vmatpush1.bf16.msra.mxu0 0
    %170 = vmatprep.subr.bf16.mxu0 0
    %171 = vmatpush1.bf16.msra.mxu0 0
    %172 = vmatprep.subr.bf16.mxu0 0
    %173 = vmatpush1.bf16.msra.mxu0 0
    %174 = vmatprep.mubr.bf16.mxu0 0
    %175 = vmatmul.mubr.bf16.gmra.mrb[0].mxu0 %v97
    %v176 = vpop.f32.mrb[0].mxu0
    %v177 = vadd.f32 0.0, %v176
    %v178 = vpop.f32.mrb[0].mxu0
    %v179 = vadd.f32 0.0, %v178
    %v180 = vpop.f32.mrb[0].mxu0
    %v181 = vadd.f32 0.0, %v180
    %v182 = vpop.f32.mrb[0].mxu0
    %v183 = vadd.f32 0.0, %v182
    %184 = vdwg.mxu0
    %v185 = vld [vmem:[%s2] sm:$0xff]
    %v186 = vld [vmem:[%s2 + $0x8] sm:$0xff]
    %v187 = vlaneseq
    %v188 = vand.u32 %v187, 127
    %v189 = vadd.s32 %v188, 128
    %v190 = vadd.s32 %v188, 256
    %v191 = vadd.s32 %v188, 384
    %s192 = smul.u32 0, 512
    %s193 = ssub.s32 256, %s192
    %v194 = vstv %s193
    %vm195 = vcmp.lt.s32.totalorder %v188, %v194
    %vm196 = vcmp.lt.s32.totalorder %v189, %v194
    %vm197 = vcmp.lt.s32.totalorder %v190, %v194
    %vm198 = vcmp.lt.s32.totalorder %v191, %v194
    %v199 = vsel %vm195, %v134, -inf
    %v200 = vsel %vm196, %v136, -inf
    %v201 = vsel %vm197, %v177, -inf
    %v202 = vsel %vm198, %v179, -inf
    %v203 = vsel %vm195, %v138, -inf
    %v204 = vsel %vm196, %v140, -inf
    %v205 = vsel %vm197, %v181, -inf
    %v206 = vsel %vm198, %v183, -inf
    %v207 = vstv %s192
    %v208 = vsub.s32 %v185, %v207
    %v209 = vsub.s32 %v186, %v207
    %210 = vset.pattern.permute.xlu0 0
    %211 = vperm.xlu0 %210, %v208
    %v212 = vpop.permute.xlu0 %211
    %213 = vset.pattern.permute.xlu0 0
    %214 = vperm.xlu0 %213, %v209
    %v215 = vpop.permute.xlu0 %214
    %vm216 = vcmp.eq.s32.totalorder %v188, %v212
    %vm217 = vcmp.eq.s32.totalorder %v189, %v212
    %vm218 = vcmp.eq.s32.totalorder %v190, %v212
    %vm219 = vcmp.eq.s32.totalorder %v191, %v212
    %vm220 = vcmp.eq.s32.totalorder %v188, %v215
    %vm221 = vcmp.eq.s32.totalorder %v189, %v215
    %vm222 = vcmp.eq.s32.totalorder %v190, %v215
    %vm223 = vcmp.eq.s32.totalorder %v191, %v215
    %v224 = vld [vmem:[#allocation4] sm:$0xff]
    %v225 = vld [vmem:[#allocation4 + $0x8] sm:$0xff]
    %v226 = vsel %vm216, %v199, 0.0
    %v227 = vsel %vm217, %v200, 0.0
    %v228 = vsel %vm218, %v201, 0.0
    %v229 = vsel %vm219, %v202, 0.0
    %v230 = vsel %vm220, %v203, 0.0
    %v231 = vsel %vm221, %v204, 0.0
    %v232 = vsel %vm222, %v205, 0.0
    %v233 = vsel %vm223, %v206, 0.0
    %v234 = vadd.f32 %v226, %v227
    %v235 = vadd.f32 %v234, %v228
    %v236 = vadd.f32 %v235, %v229
    %237 = vadd.xlane.f32.xlu0 %v236
    %v238 = vpop.xlane.xlu0 %237
    %v239 = vadd.f32 %v230, %v231
    %v240 = vadd.f32 %v239, %v232
    %v241 = vadd.f32 %v240, %v233
    %242 = vadd.xlane.f32.xlu0 %v241
    %v243 = vpop.xlane.xlu0 %242
    %v244 = vadd.f32 %v224, %v238
    %v245 = vadd.f32 %v225, %v243
    %vm246 = vcmask 7168
    %247 = vst.msk [vmem:[#allocation4] sm:$0xff] %vm246, %v244
    %248 = vst.msk [vmem:[#allocation4 + $0x8] sm:$0xff] %vm246, %v245
    %v249 = vld [vmem:[#allocation2] sm:$0xff]
    %v250 = vld [vmem:[#allocation2 + $0x8] sm:$0xff]
    %v251 = vmax.f32 %v199, %v201
    %v252 = vmax.f32 %v200, %v202
    %v253 = vmax.f32 %v251, %v252
    %254 = vmax.xlane.f32.xlu0 %v253
    %v255 = vpop.xlane.xlu0 %254
    %v256 = vmax.f32 %v203, %v205
    %v257 = vmax.f32 %v204, %v206
    %v258 = vmax.f32 %v256, %v257
    %259 = vmax.xlane.f32.xlu0 %v258
    %v260 = vpop.xlane.xlu0 %259
    %v261 = vmax.f32 %v249, %v255
    %v262 = vmax.f32 %v250, %v260
    %v263 = vld [vmem:[#allocation3] sm:$0xff]
    %v264 = vld [vmem:[#allocation3 + $0x8] sm:$0xff]
    %v265 = vsub.f32 %v249, %v261
    %v266 = vsub.f32 %v250, %v262
    %v267 = vmul.f32 %v265, 1.442695
    %v268 = vpow.pop %v267
    %v269 = vmul.f32 %v266, 1.442695
    %v270 = vpow.pop %v269
    %v271 = vmul.f32 %v263, %v268
    %v272 = vmul.f32 %v264, %v270
    %274 = vset.pattern.permute.xlu0 0
    %275 = vperm.xlu0 %274, %v261
    %v276 = vpop.permute.xlu0 %275
    %279 = vset.pattern.permute.xlu0 0
    %280 = vperm.xlu0 %279, %v262
    %v281 = vpop.permute.xlu0 %280
    %v283 = vsub.f32 %v199, %v276
    %v284 = vsub.f32 %v200, %v276
    %v285 = vsub.f32 %v201, %v276
    %v286 = vsub.f32 %v202, %v276
    %v287 = vsub.f32 %v203, %v281
    %v288 = vsub.f32 %v204, %v281
    %v289 = vsub.f32 %v205, %v281
    %v290 = vsub.f32 %v206, %v281
    %v291 = vmul.f32 %v283, 1.442695
    %v292 = vpow.pop %v291
    %v293 = vmul.f32 %v284, 1.442695
    %v294 = vpow.pop %v293
    %v295 = vmul.f32 %v285, 1.442695
    %v296 = vpow.pop %v295
    %v297 = vmul.f32 %v286, 1.442695
    %v298 = vpow.pop %v297
    %v299 = vmul.f32 %v287, 1.442695
    %v300 = vpow.pop %v299
    %v301 = vmul.f32 %v288, 1.442695
    %v302 = vpow.pop %v301
    %v303 = vmul.f32 %v289, 1.442695
    %v304 = vpow.pop %v303
    %v305 = vmul.f32 %v290, 1.442695
    %v306 = vpow.pop %v305
    %v307 = vadd.f32 %v292, %v294
    %v308 = vadd.f32 %v307, %v296
    %v309 = vadd.f32 %v308, %v298
    %310 = vadd.xlane.f32.xlu0 %v309
    %v311 = vpop.xlane.xlu0 %310
    %v312 = vadd.f32 %v300, %v302
    %v313 = vadd.f32 %v312, %v304
    %v314 = vadd.f32 %v313, %v306
    %315 = vadd.xlane.f32.xlu0 %v314
    %v316 = vpop.xlane.xlu0 %315
    %v317 = vadd.f32 %v271, %v311
    %v318 = vadd.f32 %v272, %v316
    %319 = vst.msk [vmem:[#allocation3] sm:$0xff] %vm246, %v317
    %320 = vst.msk [vmem:[#allocation3 + $0x8] sm:$0xff] %vm246, %v318
    %321 = vst.msk [vmem:[#allocation2] sm:$0xff] %vm246, %v261
    %322 = vst.msk [vmem:[#allocation2 + $0x8] sm:$0xff] %vm246, %v262
    // Predicated region
    $region22: #{fused_cross_entropy.1} parent=1 // pred_check
      %p323 = pneg %p29
    $region23: #{fused_cross_entropy.1} parent=1 // pred_check_branch
      %325 = sbr.rel (%p323) target = $region25
    $region24: #{fused_cross_entropy.1} parent=1 // pred_region
      %vm326 = vcmp.ne.s32.totalorder %v185, 4294967196
      %vm327 = vcmp.ne.s32.totalorder %v186, 4294967196
      %v328 = vld [vmem:[#allocation2] sm:$0xff]
      %v329 = vld [vmem:[#allocation2 + $0x8] sm:$0xff]
      %v330 = vld [vmem:[#allocation3] sm:$0xff]
      %v331 = vld [vmem:[#allocation3 + $0x8] sm:$0xff]
      %v332 = vlog2.pop %v330
      %v333 = vmul.f32 %v332, 0.6931472
      %v334 = vlog2.pop %v331
      %v335 = vmul.f32 %v334, 0.6931472
      %v336 = vadd.f32 %v328, %v333
      %v337 = vadd.f32 %v329, %v335
      %v338 = vld [vmem:[#allocation4] sm:$0xff]
      %v339 = vld [vmem:[#allocation4 + $0x8] sm:$0xff]
      %v340 = vsub.f32 %v336, %v338
      %v341 = vsub.f32 %v337, %v339
      %v342 = vsel %vm326, %v340, 0.0
      %v343 = vsel %vm327, %v341, 0.0
      %344 = vst.msk [vmem:[%s3] sm:$0xff] %vm246, %v342
      %345 = vst.msk [vmem:[%s3 + $0x8] sm:$0xff] %vm246, %v343
    $region25: #{fused_cross_entropy.1} parent=1 // pred_fallthru
      _
    // Predicated region
    $region26: #{fused_cross_entropy.1} parent=1 // pred_check
      _
    $region27: #{fused_cross_entropy.1} parent=1 // pred_check_branch
      %347 = sbr.rel (0) target = $region29
    $region28: #{fused_cross_entropy.1} parent=1 // pred_region
      _
    $region29: #{fused_cross_entropy.1} parent=1 // pred_fallthru
      _
    // Predicated region
    $region30: #{fused_cross_entropy.1} parent=1 // pred_check
      _
    $region31: #{fused_cross_entropy.1} parent=1 // pred_check_branch
      %349 = sbr.rel (0) target = $region33
    $region32: #{fused_cross_entropy.1} parent=1 // pred_region
      _
    $region33: #{fused_cross_entropy.1} parent=1 // pred_fallthru
      _
    %350 = vsyncpa [#allocation6], 1

</llo_original>
